<compile_context>
chip_gen: v7x
topology: tpu7x:2x2x1
jax: 0.10.0
libtpu: 0.0.40
codegen_flags: <defaults>
</compile_context>

<pallas_src>
import functools

import jax
import jax.numpy as jnp
from jax.experimental import pallas as pl
from jax.experimental.pallas import tpu as pltpu


def _round_up(x, m):
    return ((x + m - 1) // m) * m


@functools.lru_cache(maxsize=1)
def _vmem_budget_bytes():
    """Usable per-core VMEM budget, leaving headroom for compiler scratch."""
    cap = 64 * 1024 * 1024  # conservative fallback (v7x has 64 MiB per TC)
    try:
        cap = int(pltpu.get_tpu_info().vmem_capacity_bytes)
    except Exception:
        pass
    # 64 MiB -> 56 MiB usable, 128 MiB (v5e/v6e) -> 112 MiB usable.
    return cap - max(8 * 1024 * 1024, cap // 8)


def _vmem_limit(need_bytes, cap):
    # Always set explicitly (portable across v5e/v6e/v7x scoped defaults);
    # keep at least ~32 MiB so the compiler has room for internal scratch.
    return min(max(int(need_bytes * 1.3) + (4 << 20), 32 << 20), cap)


def _spec(block_shape, index_map, buffer_count=None):
    """BlockSpec helper: single/multi-buffering with graceful fallback."""
    if buffer_count is not None:
        try:
            return pl.BlockSpec(block_shape, index_map,
                                pipeline_mode=pl.Buffered(buffer_count))
        except TypeError:  # older API without pipeline_mode
            pass
    return pl.BlockSpec(block_shape, index_map)


# ----------------------------- kernels ---------------------------------- #

def _resident_kernel(x_ref, w1_ref, b1_ref, w2_ref, b2_ref, o_ref):
    """relu( relu(x@W1 + b1) @ W2 + b2 + x ); both weights VMEM-resident.

    x_ref:  (TB, Dp) f32   -- batch tile (also the residual)
    w1/w2:  (Dp, Dp) bf16  -- resident across the grid (Buffered(1))
    b1/b2:  (1, Dp)  f32
    o_ref:  (TB, Dp)
    """
    x = x_ref[...]                                    # f32, kept for residual
    h = jnp.dot(x.astype(jnp.bfloat16), w1_ref[...],
                preferred_element_type=jnp.float32)   # MXU, f32 accumulate
    h = jnp.maximum(h + b1_ref[...], 0.0)
    # Dropout (eval mode) == identity.
    y = jnp.dot(h.astype(jnp.bfloat16), w2_ref[...],
                preferred_element_type=jnp.float32)
    o_ref[...] = jnp.maximum(y + b2_ref[...] + x, 0.0).astype(o_ref.dtype)


def _tiled_kernel(x_ref, w1_ref, b1_ref, w2_ref, b2_ref, o_ref, acc_ref):
    """Hidden-dim-tiled variant for large D: grid=(batch, hidden).

    Per step j: h_j = relu(x @ W1[:, j] + b1[j]);  acc += h_j @ W2[j, :].
    Finalize at the last hidden step with bias + residual + ReLU.
    """
    j = pl.program_id(1)

    @pl.when(j == 0)
    def _():
        acc_ref[...] = jnp.zeros_like(acc_ref)

    x = x_ref[...]
    h = jnp.dot(x.astype(jnp.bfloat16), w1_ref[...],
                preferred_element_type=jnp.float32)
    h = jnp.maximum(h + b1_ref[...], 0.0)             # (TB, TH) hidden slice
    acc_ref[...] += jnp.dot(h.astype(jnp.bfloat16), w2_ref[...],
                            preferred_element_type=jnp.float32)

    @pl.when(j == pl.num_programs(1) - 1)
    def _():
        o_ref[...] = jnp.maximum(acc_ref[...] + b2_ref[...] + x,
                                 0.0).astype(o_ref.dtype)


# ----------------------------- wrappers ---------------------------------- #

def prepare_params(w1, b1, w2, b2, *, lane=None):
    """Pad + cast parameters ONCE (hoisted out of the per-call hot path).

    Weights are stored pre-transposed, i.e. y = x @ W + b matches PyTorch's
    x @ W.T + b. Returns (w1p, b1p, w2p, b2p): feature dim zero-padded to a
    lane-dense multiple, weights in bf16 (MXU operands), biases in f32.
    """
    D = w1.shape[0]
    if lane is None:
        # 256-wide MXU passes on v6e/v7x; keep 128 for small D where the
        # extra padding FLOPs would dominate (also matches v5e's 128x128 MXU).
        lane = 256 if D >= 512 else 128
    Dp = _round_up(D, lane)
    pad2 = ((0, Dp - D), (0, Dp - D))
    w1p = jnp.pad(w1.astype(jnp.float32), pad2).astype(jnp.bfloat16)
    w2p = jnp.pad(w2.astype(jnp.float32), pad2).astype(jnp.bfloat16)
    b1p = jnp.pad(b1.astype(jnp.float32), (0, Dp - D)).reshape(1, Dp)
    b2p = jnp.pad(b2.astype(jnp.float32), (0, Dp - D)).reshape(1, Dp)
    return w1p, b1p, w2p, b2p


@functools.partial(jax.jit, static_argnames=(
    "block_b", "hidden_tile", "out_dtype", "force_pallas", "force_tiled"))
def full_res_layer(x, w1p, b1p, w2p, b2p, *, block_b=None, hidden_tile=None,
                   out_dtype=jnp.float32, force_pallas=False,
                   force_tiled=False):
    """x: (B, D); padded params from prepare_params(). Returns (B, D)."""
    B, D = x.shape
    Dp = w1p.shape[0]

    # Tiny shapes: the pad/slice wrapper ops + fixed pallas_call overhead
    # dominate; a plain fused XLA expression is at least as fast.
    if not force_pallas and B * D < 512 * 256:
        w1 = w1p[:D, :D].astype(jnp.float32)
        w2 = w2p[:D, :D].astype(jnp.float32)
        h = jnp.maximum(x @ w1 + b1p[0, :D], 0.0)
        y = jnp.maximum(h @ w2 + b2p[0, :D] + x, 0.0)
        return y.astype(out_dtype)

    cap = _vmem_budget_bytes()

    # Resident-weight footprint: W1 + W2 (bf16, single-buffered) + biases.
    weight_bytes = 2 * Dp * Dp * 2 + 2 * Dp * 4

    if block_b is None:
        tb = min(_round_up(B, 8), 512)
        # Shrink the batch tile until the double-buffered f32 x/out tiles fit
        # next to the resident weights (16 = 2 arrays * 2 buffers * 4 bytes).
        while tb > 8 and weight_bytes + 16 * tb * Dp > cap:
            tb = _round_up(max(tb // 2, 8), 8)
        # Prefer >= 2 grid steps so the "parallel" batch axis can shard across
        # both TensorCores on megacore parts (v7x). No-op for tiny batches.
        if _round_up(B, tb) // tb < 2 and _round_up(B, tb) >= 128:
            tb = _round_up(_round_up(B, tb) // 2, 8)
    else:
        tb = block_b

    use_tiled = force_tiled or (weight_bytes + 16 * tb * Dp > cap)

    # Zero-padding: padded feature columns stay exactly zero end-to-end
    # (zero weight rows/cols, zero bias, zero x cols, relu(0)=0). Padded
    # *batch rows* do become nonzero (h = relu(b1), ...) but are sliced off
    # below; they only cost compute when B is not a multiple of the tile.

    if not use_tiled:
        Bp = _round_up(B, tb)
        xp = jnp.pad(x.astype(jnp.float32), ((0, Bp - B), (0, Dp - D)))
        need = weight_bytes + 16 * tb * Dp
        out = pl.pallas_call(
            _resident_kernel,
            out_shape=jax.ShapeDtypeStruct((Bp, Dp), out_dtype),
            grid=(Bp // tb,),
            in_specs=[
                _spec((tb, Dp), lambda i: (i, 0)),        # x: batch-tiled
                _spec((Dp, Dp), lambda i: (0, 0), 1),     # W1: resident, 1 buf
                _spec((1, Dp), lambda i: (0, 0), 1),      # b1: resident, 1 buf
                _spec((Dp, Dp), lambda i: (0, 0), 1),     # W2: resident, 1 buf
                _spec((1, Dp), lambda i: (0, 0), 1),      # b2: resident, 1 buf
            ],
            out_specs=pl.BlockSpec((tb, Dp), lambda i: (i, 0)),
            compiler_params=pltpu.CompilerParams(
                dimension_semantics=("parallel",),
                vmem_limit_bytes=_vmem_limit(need, cap)),
        )(xp, w1p, b1p, w2p, b2p)
        return out[:B, :D]

    # ---- Hidden-dim-tiled fallback (weights too large to stay resident) ----
    th = hidden_tile
    if th is None:
        th = 128
        for cand in (1024, 512, 256):
            if Dp % cand == 0:
                th = cand
                break

    def tiled_need(tb_, th_):
        return (2 * 2 * Dp * th_ * 2      # W1 + W2 tiles, bf16, double-buffered
                + 2 * 2 * th_ * 4         # b1 tile, double-buffered
                + Dp * 4                  # b2, single-buffered
                + 16 * tb_ * Dp           # x + out tiles, f32, double-buffered
                + 4 * tb_ * Dp)           # f32 accumulator scratch

    if block_b is None:
        while tb > 8 and tiled_need(tb, th) > cap:
            tb = _round_up(max(tb // 2, 8), 8)
    if hidden_tile is None:
        while th > 128 and Dp % (th // 2) == 0 and tiled_need(tb, th) > cap:
            th //= 2

    Bp = _round_up(B, tb)
    xp = jnp.pad(x.astype(jnp.float32), ((0, Bp - B), (0, Dp - D)))
    out = pl.pallas_call(
        _tiled_kernel,
        out_shape=jax.ShapeDtypeStruct((Bp, Dp), out_dtype),
        grid=(Bp // tb, Dp // th),
        in_specs=[
            _spec((tb, Dp), lambda i, j: (i, 0)),         # x (constant over j)
            _spec((Dp, th), lambda i, j: (0, j)),         # W1 column block
            _spec((1, th), lambda i, j: (0, j)),          # b1 slice
            _spec((th, Dp), lambda i, j: (j, 0)),         # W2 row block
            _spec((1, Dp), lambda i, j: (0, 0), 1),       # b2: invariant, 1 buf
        ],
        out_specs=pl.BlockSpec((tb, Dp), lambda i, j: (i, 0)),
        scratch_shapes=[pltpu.VMEM((tb, Dp), jnp.float32)],
        compiler_params=pltpu.CompilerParams(
            dimension_semantics=("parallel", "arbitrary"),
            vmem_limit_bytes=_vmem_limit(tiled_need(tb, th), cap)),
    )(xp, w1p, b1p, w2p, b2p)
    return out[:B, :D]


# ------------------------------- demo ------------------------------------ #

def _reference(x, w1, b1, w2, b2):
    h = jnp.maximum(x @ w1 + b1, 0.0)
    return jnp.maximum(h @ w2 + b2 + x, 0.0)


def _make_inputs(key, B, D):
    kx, kw1, kb1, kw2, kb2 = jax.random.split(key, 5)
    x = jax.random.normal(kx, (B, D), jnp.float32)
    # Deterministic init roughly matching nn.Linear's uniform scale; weights
    # pre-transposed so y = x @ W + b matches PyTorch's x @ W.T + b.
    lim = 1.0 / jnp.sqrt(jnp.float32(D))
    w1 = jax.random.uniform(kw1, (D, D), jnp.float32, -lim, lim)
    b1 = jax.random.uniform(kb1, (D,), jnp.float32, -lim, lim)
    w2 = jax.random.uniform(kw2, (D, D), jnp.float32, -lim, lim)
    b2 = jax.random.uniform(kb2, (D,), jnp.float32, -lim, lim)
    return x, w1, b1, w2, b2


if __name__ == "__main__":
    # --- Test 1: resident-weight kernel (small demo shape, forced Pallas) ---
    B, D = 8, 32
    x, w1, b1, w2, b2 = _make_inputs(jax.random.PRNGKey(0), B, D)
    params = prepare_params(w1, b1, w2, b2)
    out = jax.block_until_ready(full_res_layer(x, *params, force_pallas=True))
    ref = _reference(x, w1, b1, w2, b2)
    assert out.shape == (B, D)
    # bf16 MXU operands (f32 accumulate) vs. pure-f32 reference.
    assert jnp.allclose(out, ref, atol=3e-2, rtol=3e-2), float(
        jnp.max(jnp.abs(out - ref)))

    # --- Test 2: hidden-dim-tiled fallback (2 hidden steps, padded dims) ---
    B2, D2 = 24, 160                      # Dp = 256 -> two 128-wide hidden tiles
    x2, w1_2, b1_2, w2_2, b2_2 = _make_inputs(jax.random.PRNGKey(1), B2, D2)
    params2 = prepare_params(w1_2, b1_2, w2_2, b2_2)
    out2 = jax.block_until_ready(
        full_res_layer(x2, *params2, force_pallas=True, force_tiled=True,
                       hidden_tile=128))
    ref2 = _reference(x2, w1_2, b1_2, w2_2, b2_2)
    assert out2.shape == (B2, D2)
    assert jnp.allclose(out2, ref2, atol=3e-2, rtol=3e-2), float(
        jnp.max(jnp.abs(out2 - ref2)))

    print("KERNEL_OK")
</pallas_src>

<mosaic_0001>
module attributes {stable_mosaic.version = 11 : i64} {
  func.func @_resident_kernel(%arg0: i32, %arg1: memref<8x128xf32, #tpu.memory_space<vmem>>, %arg2: memref<128x128xbf16, #tpu.memory_space<vmem>>, %arg3: memref<1x128xf32, #tpu.memory_space<vmem>>, %arg4: memref<128x128xbf16, #tpu.memory_space<vmem>>, %arg5: memref<1x128xf32, #tpu.memory_space<vmem>>, %arg6: memref<8x128xf32, #tpu.memory_space<vmem>>) attributes {dimension_semantics = [#tpu.dimension_semantics<parallel>], iteration_bounds = array<i64: 1>, scalar_prefetch = 0 : i64, scratch_operands = 0 : i64, tpu.core_type = #tpu.core_type<tc>, window_params = [{transform_indices = @transform_0, window_bounds = array<i64: 8, 128>}, {pipeline_mode = #tpu.pipeline_mode<synchronous>, transform_indices = @transform_1, window_bounds = array<i64: 128, 128>}, {pipeline_mode = #tpu.pipeline_mode<synchronous>, transform_indices = @transform_2, window_bounds = array<i64: 1, 128>}, {pipeline_mode = #tpu.pipeline_mode<synchronous>, transform_indices = @transform_3, window_bounds = array<i64: 128, 128>}, {pipeline_mode = #tpu.pipeline_mode<synchronous>, transform_indices = @transform_4, window_bounds = array<i64: 1, 128>}, {transform_indices = @transform_5, window_bounds = array<i64: 8, 128>}]} {
    %c0 = arith.constant 0 : index
    %c0_0 = arith.constant 0 : index
    %0 = vector.load %arg1[%c0, %c0_0] : memref<8x128xf32, #tpu.memory_space<vmem>>, vector<8x128xf32>
    %1 = arith.truncf %0 : vector<8x128xf32> to vector<8x128xbf16>
    %c0_1 = arith.constant 0 : index
    %c0_2 = arith.constant 0 : index
    %2 = vector.load %arg2[%c0_1, %c0_2] : memref<128x128xbf16, #tpu.memory_space<vmem>>, vector<128x128xbf16>
    %cst = arith.constant dense<0.000000e+00> : vector<8x128xf32>
    %3 = tpu.matmul %1, %2, %cst {dimension_numbers = #tpu.dot_dimension_numbers<[1], [0], [0], [1], [0, 0, 1, 1], [], []>} : vector<8x128xbf16>, vector<128x128xbf16>, vector<8x128xf32> -> vector<8x128xf32>
    %c0_3 = arith.constant 0 : index
    %c0_4 = arith.constant 0 : index
    %4 = vector.load %arg3[%c0_3, %c0_4] : memref<1x128xf32, #tpu.memory_space<vmem>>, vector<1x128xf32>
    %5 = vector.broadcast %4 : vector<1x128xf32> to vector<8x128xf32>
    %6 = arith.addf %3, %5 : vector<8x128xf32>
    %cst_5 = arith.constant 0.000000e+00 : f32
    %7 = vector.broadcast %cst_5 : f32 to vector<8x128xf32>
    %8 = arith.maximumf %6, %7 : vector<8x128xf32>
    %9 = arith.truncf %8 : vector<8x128xf32> to vector<8x128xbf16>
    %c0_6 = arith.constant 0 : index
    %c0_7 = arith.constant 0 : index
    %10 = vector.load %arg4[%c0_6, %c0_7] : memref<128x128xbf16, #tpu.memory_space<vmem>>, vector<128x128xbf16>
    %cst_8 = arith.constant dense<0.000000e+00> : vector<8x128xf32>
    %11 = tpu.matmul %9, %10, %cst_8 {dimension_numbers = #tpu.dot_dimension_numbers<[1], [0], [0], [1], [0, 0, 1, 1], [], []>} : vector<8x128xbf16>, vector<128x128xbf16>, vector<8x128xf32> -> vector<8x128xf32>
    %c0_9 = arith.constant 0 : index
    %c0_10 = arith.constant 0 : index
    %12 = vector.load %arg5[%c0_9, %c0_10] : memref<1x128xf32, #tpu.memory_space<vmem>>, vector<1x128xf32>
    %13 = vector.broadcast %12 : vector<1x128xf32> to vector<8x128xf32>
    %14 = arith.addf %11, %13 : vector<8x128xf32>
    %15 = arith.addf %14, %0 : vector<8x128xf32>
    %cst_11 = arith.constant 0.000000e+00 : f32
    %16 = vector.broadcast %cst_11 : f32 to vector<8x128xf32>
    %17 = arith.maximumf %15, %16 : vector<8x128xf32>
    %c0_12 = arith.constant 0 : index
    %c0_13 = arith.constant 0 : index
    %18 = vector.load %arg6[%c0_12, %c0_13] : memref<8x128xf32, #tpu.memory_space<vmem>>, vector<8x128xf32>
    tpu.vector_store %arg6[%c0_12, %c0_13], %17 {strides = array<i32>} : memref<8x128xf32, #tpu.memory_space<vmem>>, vector<8x128xf32>,
    return
  }
  func.func @transform_0(%arg0: i32) -> (i32, i32) {
    %c0_i32 = arith.constant 0 : i32
    %c0_i32_0 = arith.constant 0 : i32
    return %arg0, %c0_i32 : i32, i32
  }
  func.func @transform_1(%arg0: i32) -> (i32, i32) {
    %c0_i32 = arith.constant 0 : i32
    %c0_i32_0 = arith.constant 0 : i32
    %c0_i32_1 = arith.constant 0 : i32
    return %c0_i32, %c0_i32_0 : i32, i32
  }
  func.func @transform_2(%arg0: i32) -> (i32, i32) {
    %c0_i32 = arith.constant 0 : i32
    %c0_i32_0 = arith.constant 0 : i32
    %c0_i32_1 = arith.constant 0 : i32
    return %c0_i32, %c0_i32_0 : i32, i32
  }
  func.func @transform_3(%arg0: i32) -> (i32, i32) {
    %c0_i32 = arith.constant 0 : i32
    %c0_i32_0 = arith.constant 0 : i32
    %c0_i32_1 = arith.constant 0 : i32
    return %c0_i32, %c0_i32_0 : i32, i32
  }
  func.func @transform_4(%arg0: i32) -> (i32, i32) {
    %c0_i32 = arith.constant 0 : i32
    %c0_i32_0 = arith.constant 0 : i32
    %c0_i32_1 = arith.constant 0 : i32
    return %c0_i32, %c0_i32_0 : i32, i32
  }
  func.func @transform_5(%arg0: i32) -> (i32, i32) {
    %c0_i32 = arith.constant 0 : i32
    %c0_i32_0 = arith.constant 0 : i32
    return %arg0, %c0_i32 : i32, i32
  }
}

</mosaic_0001>

<llo_original>
// kernel: full_res_layer.1
$region0: #{full_res_layer.1}
  #allocation0 [shape = 'u32[]', space=smem, size = 0x4, offset = 0x4, fixed_abs, tag = 'smem constant byte address 0x4 - core index']
  #allocation1 [shape = 'u32[144,128]{1,0:T(1,128)}', space=vmem, size = 0x12000, scoped, tag = 'internal scratch']
  %s0 = inlined_call_operand.vmem [shape: f32[8,128], index: 0, kind: input, shape index: {}]
  %s1 = inlined_call_operand.hbm [shape: bf16[128,128], index: 1, kind: input, shape index: {}]
  %s2 = inlined_call_operand.vmem [shape: f32[1,128], index: 2, kind: input, shape index: {}]
  %s3 = inlined_call_operand.hbm [shape: bf16[128,128], index: 3, kind: input, shape index: {}]
  %s4 = inlined_call_operand.vmem [shape: f32[1,128], index: 4, kind: input, shape index: {}]
  %s5 = inlined_call_operand.hbm [shape: f32[8,128], index: 5, kind: output, shape index: {}]
  %s6 = sld [smem:[#allocation0]]
  $region38: #{full_res_layer.1} parent=0
    _
  %s8 = ssub.s32 1, %s6
  %s9 = scalar_select 0, %s8, %s6
  $region1: #{full_res_layer.1} parent=0
    #allocation2 [shape = 'u8[32768]{0}', space=vmem, size = 0x8000, scoped, tag = 'input window, operand 1, single buffered']
    #allocation3 [shape = 's32[1]{0}', space=sflag, size = 0x4, scoped, tag = 'scoped memory for full_res_layer.1']
    #allocation4 [shape = 's32[1]{0}', space=sflag, size = 0x4, scoped, tag = 'scoped memory for full_res_layer.1']
    #allocation5 [shape = 'u8[32768]{0}', space=vmem, size = 0x8000, scoped, tag = 'input window, operand 3, single buffered']
    #allocation6 [shape = 's32[1]{0}', space=sflag, size = 0x4, scoped, tag = 'scoped memory for full_res_layer.1']
    #allocation7 [shape = 'u8[4096]{0}', space=vmem, size = 0x1000, scoped, tag = 'output window, operand 0, single buffered']
    %10 = vsyncpa [#allocation3], 0
    %11 = vsyncpa [#allocation6], 0
    %12 = vsyncpa [#allocation4], 0
    // Predicated region
    $region2: #{full_res_layer.1} parent=1 // pred_check
      _
    $region3: #{full_res_layer.1} parent=1 // pred_check_branch
      %14 = sbr.rel (0) target = $region5
    $region4: #{full_res_layer.1} parent=1 // pred_region
      _
    $region5: #{full_res_layer.1} parent=1 // pred_fallthru
      _
    // Predicated region
    $region6: #{full_res_layer.1} parent=1 // pred_check
      _
    $region7: #{full_res_layer.1} parent=1 // pred_check_branch
      %16 = sbr.rel (0) target = $region9
    $region8: #{full_res_layer.1} parent=1 // pred_region
      %s18 = ssub.s32 1024, 1024
      %19 = vsyncadd [#allocation3], %s18
      %s20 = sshll.u32 [#allocation2], 4
      %s21 = int_to_ptr.vmem [resolvable:$true] %s20
      %26 = dma.hbm_to_vmem [thread:$0]  %s1, 1024, %s21, [#allocation3], 64, 64, 4
    $region9: #{full_res_layer.1} parent=1 // pred_fallthru
      _
    // Predicated region
    $region10: #{full_res_layer.1} parent=1 // pred_check
      _
    $region11: #{full_res_layer.1} parent=1 // pred_check_branch
      %28 = sbr.rel (0) target = $region13
    $region12: #{full_res_layer.1} parent=1 // pred_region
      _
    $region13: #{full_res_layer.1} parent=1 // pred_fallthru
      _
    // Predicated region
    $region14: #{full_res_layer.1} parent=1 // pred_check
      _
    $region15: #{full_res_layer.1} parent=1 // pred_check_branch
      %30 = sbr.rel (0) target = $region17
    $region16: #{full_res_layer.1} parent=1 // pred_region
      %s32 = ssub.s32 1024, 1024
      %33 = vsyncadd [#allocation6], %s32
      %s34 = sshll.u32 [#allocation5], 4
      %s35 = int_to_ptr.vmem [resolvable:$true] %s34
      %40 = dma.hbm_to_vmem [thread:$0]  %s3, 1024, %s35, [#allocation6], 64, 64, 4
    $region17: #{full_res_layer.1} parent=1 // pred_fallthru
      _
    // Predicated region
    $region18: #{full_res_layer.1} parent=1 // pred_check
      _
    $region19: #{full_res_layer.1} parent=1 // pred_check_branch
      %42 = sbr.rel (0) target = $region21
    $region20: #{full_res_layer.1} parent=1 // pred_region
      _
    $region21: #{full_res_layer.1} parent=1 // pred_fallthru
      _
    // Predicated region
    $region22: #{full_res_layer.1} parent=1 // pred_check
      _
    $region23: #{full_res_layer.1} parent=1 // pred_check_branch
      %44 = sbr.rel (0) target = $region25
    $region24: #{full_res_layer.1} parent=1 // pred_region
      %45 = dma.done [#allocation3], 1024
    $region25: #{full_res_layer.1} parent=1 // pred_fallthru
      _
    // Predicated region
    $region26: #{full_res_layer.1} parent=1 // pred_check
      _
    $region27: #{full_res_layer.1} parent=1 // pred_check_branch
      %47 = sbr.rel (0) target = $region29
    $region28: #{full_res_layer.1} parent=1 // pred_region
      %48 = dma.done [#allocation6], 1024
    $region29: #{full_res_layer.1} parent=1 // pred_fallthru
      _
    %v50 = vld [vmem:[%s0] sm:$0xff]
    %v51 = vpack.c.bf16 %v50, %v50
    %v52 = vld [vmem:[#allocation2] sm:$0xf]
    %v53 = vld [vmem:[#allocation2 + $0x4] sm:$0xf]
    %v54 = vld [vmem:[#allocation2 + $0x8] sm:$0xf]
    %v55 = vld [vmem:[#allocation2 + $0xc] sm:$0xf]
    %v56 = vld [vmem:[#allocation2 + $0x10] sm:$0xf]
    %v57 = vld [vmem:[#allocation2 + $0x14] sm:$0xf]
    %v58 = vld [vmem:[#allocation2 + $0x18] sm:$0xf]
    %v59 = vld [vmem:[#allocation2 + $0x1c] sm:$0xf]
    %v60 = vld [vmem:[#allocation2 + $0x20] sm:$0xf]
    %v61 = vld [vmem:[#allocation2 + $0x24] sm:$0xf]
    %v62 = vld [vmem:[#allocation2 + $0x28] sm:$0xf]
    %v63 = vld [vmem:[#allocation2 + $0x2c] sm:$0xf]
    %v64 = vld [vmem:[#allocation2 + $0x30] sm:$0xf]
    %v65 = vld [vmem:[#allocation2 + $0x34] sm:$0xf]
    %v66 = vld [vmem:[#allocation2 + $0x38] sm:$0xf]
    %v67 = vld [vmem:[#allocation2 + $0x3c] sm:$0xf]
    %v68 = vld [vmem:[%s2] sm:$0x1]
    %v70 = vlaneseq
    %v71 = vshrl.u32 %v70, 7
    %v72 = vsub.s32 0, %v71
    %v73 = vrot.slane %v68, %v72
    %v91 = vunpack.c.l.b16 %v52
    %v92 = vunpack.c.l.b16 %v53
    %v93 = vunpack.c.l.b16 %v54
    %v94 = vunpack.c.l.b16 %v55
    %v95 = vunpack.c.l.b16 %v56
    %v96 = vunpack.c.l.b16 %v57
    %v97 = vunpack.c.l.b16 %v58
    %v98 = vunpack.c.l.b16 %v59
    %v99 = vunpack.c.l.b16 %v60
    %v100 = vunpack.c.l.b16 %v61
    %v101 = vunpack.c.l.b16 %v62
    %v102 = vunpack.c.l.b16 %v63
    %v103 = vunpack.c.l.b16 %v64
    %v104 = vunpack.c.l.b16 %v65
    %v105 = vunpack.c.l.b16 %v66
    %v106 = vunpack.c.l.b16 %v67
    %v107 = vpack.c.b16 %v92, %v91
    %v108 = vpack.c.b16 %v94, %v93
    %v109 = vpack.c.b16 %v96, %v95
    %v110 = vpack.c.b16 %v98, %v97
    %v111 = vpack.c.b16 %v100, %v99
    %v112 = vpack.c.b16 %v102, %v101
    %v113 = vpack.c.b16 %v104, %v103
    %v114 = vpack.c.b16 %v106, %v105
    %123 = vmatprep.subr.bf16.mxu0 0
    %124 = vmatpush1.bf16.msra.mxu0 %v107
    %125 = vmatprep.subr.bf16.mxu0 0
    %126 = vmatpush1.bf16.msra.mxu0 %v108
    %127 = vmatprep.subr.bf16.mxu0 0
    %128 = vmatpush1.bf16.msra.mxu0 %v109
    %129 = vmatprep.subr.bf16.mxu0 0
    %130 = vmatpush1.bf16.msra.mxu0 %v110
    %131 = vmatprep.subr.bf16.mxu0 0
    %132 = vmatpush1.bf16.msra.mxu0 %v111
    %133 = vmatprep.subr.bf16.mxu0 0
    %134 = vmatpush1.bf16.msra.mxu0 %v112
    %135 = vmatprep.subr.bf16.mxu0 0
    %136 = vmatpush1.bf16.msra.mxu0 %v113
    %137 = vmatprep.subr.bf16.mxu0 0
    %138 = vmatpush1.bf16.msra.mxu0 %v114
    %139 = vmatprep.subr.bf16.mxu0 0
    %140 = vmatpush1.bf16.msra.mxu0 0
    %141 = vmatprep.subr.bf16.mxu0 0
    %142 = vmatpush1.bf16.msra.mxu0 0
    %143 = vmatprep.subr.bf16.mxu0 0
    %144 = vmatpush1.bf16.msra.mxu0 0
    %145 = vmatprep.subr.bf16.mxu0 0
    %146 = vmatpush1.bf16.msra.mxu0 0
    %147 = vmatprep.subr.bf16.mxu0 0
    %148 = vmatpush1.bf16.msra.mxu0 0
    %149 = vmatprep.subr.bf16.mxu0 0
    %150 = vmatpush1.bf16.msra.mxu0 0
    %151 = vmatprep.subr.bf16.mxu0 0
    %152 = vmatpush1.bf16.msra.mxu0 0
    %153 = vmatprep.subr.bf16.mxu0 0
    %154 = vmatpush1.bf16.msra.mxu0 0
    %155 = vmatprep.mubr.bf16.mxu0 0
    %156 = vmatmul.mubr.bf16.gmra.mrb[0].mxu0 %v51
    %v157 = vpop.f32.mrb[0].mxu0
    %v158 = vadd.f32 %v73, %v157
    %v159 = vpop.f32.mrb[0].mxu0
    %v160 = vpop.f32.mrb[0].mxu0
    %v161 = vpop.f32.mrb[0].mxu0
    %162 = vdwg.mxu0
    %v163 = vmax.f32 %v158, 0.0
    %v164 = vpack.c.bf16 %v163, %v163
    %v165 = vld [vmem:[#allocation5] sm:$0xf]
    %v166 = vld [vmem:[#allocation5 + $0x4] sm:$0xf]
    %v167 = vld [vmem:[#allocation5 + $0x8] sm:$0xf]
    %v168 = vld [vmem:[#allocation5 + $0xc] sm:$0xf]
    %v169 = vld [vmem:[#allocation5 + $0x10] sm:$0xf]
    %v170 = vld [vmem:[#allocation5 + $0x14] sm:$0xf]
    %v171 = vld [vmem:[#allocation5 + $0x18] sm:$0xf]
    %v172 = vld [vmem:[#allocation5 + $0x1c] sm:$0xf]
    %v173 = vld [vmem:[#allocation5 + $0x20] sm:$0xf]
    %v174 = vld [vmem:[#allocation5 + $0x24] sm:$0xf]
    %v175 = vld [vmem:[#allocation5 + $0x28] sm:$0xf]
    %v176 = vld [vmem:[#allocation5 + $0x2c] sm:$0xf]
    %v177 = vld [vmem:[#allocation5 + $0x30] sm:$0xf]
    %v178 = vld [vmem:[#allocation5 + $0x34] sm:$0xf]
    %v179 = vld [vmem:[#allocation5 + $0x38] sm:$0xf]
    %v180 = vld [vmem:[#allocation5 + $0x3c] sm:$0xf]
    %v181 = vld [vmem:[%s4] sm:$0x1]
    %v183 = vlaneseq
    %v184 = vshrl.u32 %v183, 7
    %v185 = vsub.s32 0, %v184
    %v186 = vrot.slane %v181, %v185
    %v204 = vunpack.c.l.b16 %v165
    %v205 = vunpack.c.l.b16 %v166
    %v206 = vunpack.c.l.b16 %v167
    %v207 = vunpack.c.l.b16 %v168
    %v208 = vunpack.c.l.b16 %v169
    %v209 = vunpack.c.l.b16 %v170
    %v210 = vunpack.c.l.b16 %v171
    %v211 = vunpack.c.l.b16 %v172
    %v212 = vunpack.c.l.b16 %v173
    %v213 = vunpack.c.l.b16 %v174
    %v214 = vunpack.c.l.b16 %v175
    %v215 = vunpack.c.l.b16 %v176
    %v216 = vunpack.c.l.b16 %v177
    %v217 = vunpack.c.l.b16 %v178
    %v218 = vunpack.c.l.b16 %v179
    %v219 = vunpack.c.l.b16 %v180
    %v220 = vpack.c.b16 %v205, %v204
    %v221 = vpack.c.b16 %v207, %v206
    %v222 = vpack.c.b16 %v209, %v208
    %v223 = vpack.c.b16 %v211, %v210
    %v224 = vpack.c.b16 %v213, %v212
    %v225 = vpack.c.b16 %v215, %v214
    %v226 = vpack.c.b16 %v217, %v216
    %v227 = vpack.c.b16 %v219, %v218
    %236 = vmatprep.subr.bf16.mxu0 0
    %237 = vmatpush1.bf16.msra.mxu0 %v220
    %238 = vmatprep.subr.bf16.mxu0 0
    %239 = vmatpush1.bf16.msra.mxu0 %v221
    %240 = vmatprep.subr.bf16.mxu0 0
    %241 = vmatpush1.bf16.msra.mxu0 %v222
    %242 = vmatprep.subr.bf16.mxu0 0
    %243 = vmatpush1.bf16.msra.mxu0 %v223
    %244 = vmatprep.subr.bf16.mxu0 0
    %245 = vmatpush1.bf16.msra.mxu0 %v224
    %246 = vmatprep.subr.bf16.mxu0 0
    %247 = vmatpush1.bf16.msra.mxu0 %v225
    %248 = vmatprep.subr.bf16.mxu0 0
    %249 = vmatpush1.bf16.msra.mxu0 %v226
    %250 = vmatprep.subr.bf16.mxu0 0
    %251 = vmatpush1.bf16.msra.mxu0 %v227
    %252 = vmatprep.subr.bf16.mxu0 0
    %253 = vmatpush1.bf16.msra.mxu0 0
    %254 = vmatprep.subr.bf16.mxu0 0
    %255 = vmatpush1.bf16.msra.mxu0 0
    %256 = vmatprep.subr.bf16.mxu0 0
    %257 = vmatpush1.bf16.msra.mxu0 0
    %258 = vmatprep.subr.bf16.mxu0 0
    %259 = vmatpush1.bf16.msra.mxu0 0
    %260 = vmatprep.subr.bf16.mxu0 0
    %261 = vmatpush1.bf16.msra.mxu0 0
    %262 = vmatprep.subr.bf16.mxu0 0
    %263 = vmatpush1.bf16.msra.mxu0 0
    %264 = vmatprep.subr.bf16.mxu0 0
    %265 = vmatpush1.bf16.msra.mxu0 0
    %266 = vmatprep.subr.bf16.mxu0 0
    %267 = vmatpush1.bf16.msra.mxu0 0
    %268 = vmatprep.mubr.bf16.mxu0 0
    %269 = vmatmul.mubr.bf16.gmra.mrb[0].mxu0 %v164
    %v270 = vpop.f32.mrb[0].mxu0
    %v271 = vadd.f32 %v186, %v270
    %v272 = vpop.f32.mrb[0].mxu0
    %v273 = vpop.f32.mrb[0].mxu0
    %v274 = vpop.f32.mrb[0].mxu0
    %275 = vdwg.mxu0
    %v276 = vadd.f32 %v271, %v50
    %v277 = vmax.f32 %v276, 0.0
    %278 = vst [vmem:[#allocation7] sm:$0xff] %v277
    // Predicated region
    $region30: #{full_res_layer.1} parent=1 // pred_check
      _
    $region31: #{full_res_layer.1} parent=1 // pred_check_branch
      %280 = sbr.rel (0) target = $region33
    $region32: #{full_res_layer.1} parent=1 // pred_region
      %s282 = ssub.s32 128, 128
      %283 = vsyncadd [#allocation4], %s282
      %s285 = sshll.u32 [#allocation7], 4
      %s286 = int_to_ptr.vmem [resolvable:$true] %s285
      %288 = dma.vmem_to_hbm [thread:$0]  %s286, 128, %s5, [#allocation4]
    $region33: #{full_res_layer.1} parent=1 // pred_fallthru
      _
    // Predicated region
    $region34: #{full_res_layer.1} parent=1 // pred_check
      _
    $region35: #{full_res_layer.1} parent=1 // pred_check_branch
      %290 = sbr.rel (0) target = $region37
    $region36: #{full_res_layer.1} parent=1 // pred_region
      %291 = dma.done [#allocation4], 128
    $region37: #{full_res_layer.1} parent=1 // pred_fallthru
      _
    %292 = vsyncpa [#allocation3], 1
    %293 = vsyncpa [#allocation6], 1
    %294 = vsyncpa [#allocation4], 1

</llo_original>
